<compile_context>
chip_gen: v5e
topology: v5e:2x2
jax: 0.10.0
libtpu: 0.0.40
codegen_flags: <defaults>
</compile_context>

<pallas_src>
import functools

import jax
import jax.numpy as jnp
from jax.experimental import pallas as pl
from jax.experimental.pallas import tpu as pltpu


def _eca_kernel(w_ref, x_ref, o_ref, *, k_size, inv_hw):
    """Process a (Bt, C, HW) block of images.

    w_ref : (k_size,) f32 conv taps, scalar-prefetched into SMEM.
    x_ref : (Bt, C, HW) input block in VMEM (input dtype).
    o_ref : (Bt, C, HW) output block in VMEM.
    """
    x = x_ref[...]                                   # (Bt, C, HW)
    bt, c, hw = x.shape

    # ---- global average pool over the spatial extent ------------------------
    if x.dtype == jnp.float32:
        # Already f32: a plain lane reduction, no temporary.
        s = jnp.sum(x, axis=-1, keepdims=True)                      # (Bt, C, 1)
    else:
        # bf16/f16: MXU dot against a ones column accumulates natively to f32,
        # avoiding an f32 copy of the whole block (VMEM pressure) and keeping
        # the VPU free.  The MXU is otherwise idle in this kernel.
        ones_col = jnp.ones((hw, 1), dtype=x.dtype)
        s = jnp.dot(x.reshape(bt * c, hw), ones_col,
                    preferred_element_type=jnp.float32).reshape(bt, c, 1)
    mean = s * inv_hw                                               # f32

    # ---- 1D conv across channels (zero padding, no bias) --------------------
    # Tiny (Bt*C elements): a zero-padded column + k statically-shifted taps.
    pad = (k_size - 1) // 2
    if pad > 0:
        zpad = jnp.zeros((bt, pad, 1), dtype=jnp.float32)
        mp = jnp.concatenate([zpad, mean, zpad], axis=1)  # (Bt, C + 2*pad, 1)
    else:
        mp = mean
    y = w_ref[0] * mp[:, 0:c, :]
    for j in range(1, k_size):                            # static unroll
        y = y + w_ref[j] * mp[:, j:j + c, :]

    # ---- sigmoid gate, per-channel scale -------------------------------------
    # Gate is cast to the input dtype before the bulk multiply (matches typical
    # mixed-precision PyTorch behaviour; exact for f32 inputs).
    gate = jax.nn.sigmoid(y)                              # (Bt, C, 1) f32
    o_ref[...] = (x * gate.astype(x.dtype)).astype(o_ref.dtype)


def eca_attention(x, conv_w, k_size=3):
    """x: (B, C, H, W).  conv_w: (1, 1, k_size) Conv1d weight (no bias)."""
    B, C, H, W = x.shape
    HW = H * W

    xf = x.reshape(B, C, HW)                    # free collapse of H, W
    wv = conv_w.reshape(k_size).astype(jnp.float32)

    itemsize = jnp.dtype(x.dtype).itemsize
    img_bytes = C * HW * itemsize

    # Pick images-per-step so each block is ~4 MiB, but keep >= 2 grid steps
    # when B >= 2 so both v7x TensorCores get work (no-op on v5e/v6e).
    target_bytes = 4 << 20
    bt = max(1, min(B, target_bytes // max(img_bytes, 1)))
    if B >= 2:
        bt = min(bt, B // 2)
    while B % bt != 0:                          # keep blocks exact (no ragged tail)
        bt -= 1
    grid_steps = B // bt
    block_bytes = bt * img_bytes

    # Double-buffered input + output ~= 4x block, plus slack for f32 stats.
    # v5e's default scoped VMEM is only 16 MiB, so size this explicitly;
    # capped well under every generation's physical VMEM for these block sizes.
    vmem_limit = int(min(96 << 20, max(32 << 20, 4 * block_bytes + (4 << 20))))

    kern = functools.partial(_eca_kernel, k_size=k_size, inv_hw=1.0 / float(HW))

    # Block dims equal the full array dims on C and HW -> (8,128) rule is
    # satisfied without any wrapper-side padding; Mosaic masks the lane tail.
    x_spec = pl.BlockSpec((bt, C, HW), lambda b, w_ref: (b, 0, 0))

    cost = pl.CostEstimate(
        flops=2 * B * C * HW + 2 * B * C * k_size,
        transcendentals=B * C,
        bytes_accessed=2 * B * C * HW * itemsize,
    )

    out = pl.pallas_call(
        kern,
        out_shape=jax.ShapeDtypeStruct((B, C, HW), x.dtype),
        grid_spec=pltpu.PrefetchScalarGridSpec(
            num_scalar_prefetch=1,              # conv taps -> SMEM, once
            grid=(grid_steps,),
            in_specs=[x_spec],
            out_specs=x_spec,
        ),
        compiler_params=pltpu.CompilerParams(
            dimension_semantics=("parallel",),
            vmem_limit_bytes=vmem_limit,
        ),
        cost_estimate=cost,
    )(wv, xf)

    return out.reshape(B, C, H, W)


def eca_attention_ref(x, conv_w, k_size=3):
    """Pure-JAX reference mirroring the PyTorch ECAAttention forward."""
    B, C, H, W = x.shape
    pad = (k_size - 1) // 2
    m = jnp.mean(x.astype(jnp.float32), axis=(2, 3))            # (B, C)
    mp = jnp.pad(m, ((0, 0), (pad, pad)))
    wv = conv_w.reshape(k_size).astype(jnp.float32)
    y = sum(wv[j] * mp[:, j:j + C] for j in range(k_size))       # (B, C)
    gate = jax.nn.sigmoid(y)
    return x * gate[:, :, None, None].astype(x.dtype)


if __name__ == "__main__":
    B, C, H, W = 2, 64, 16, 16       # small shapes consistent with the module
    K = 3                            # ECA default kernel size

    key = jax.random.PRNGKey(0)
    kx, kw = jax.random.split(key)
    x = jax.random.normal(kx, (B, C, H, W), dtype=jnp.float32)
    conv_w = 0.5 * jax.random.normal(kw, (1, 1, K), dtype=jnp.float32)

    out = jax.block_until_ready(eca_attention(x, conv_w, k_size=K))
    ref = jax.block_until_ready(eca_attention_ref(x, conv_w, k_size=K))

    assert out.shape == (B, C, H, W)
    assert jnp.allclose(out, ref, atol=1e-5, rtol=1e-5), "mismatch vs reference"
    print("KERNEL_OK")
</pallas_src>

<mosaic_0001>
module attributes {stable_mosaic.version = 11 : i64} {
  func.func @_eca_kernel(%arg0: i32, %arg1: memref<3xf32, #tpu.memory_space<smem>>, %arg2: memref<1x64x256xf32, #tpu.memory_space<vmem>>, %arg3: memref<1x64x256xf32, #tpu.memory_space<vmem>>) attributes {dimension_semantics = [#tpu.dimension_semantics<parallel>], iteration_bounds = array<i64: 2>, scalar_prefetch = 1 : i64, scratch_operands = 0 : i64, tpu.core_type = #tpu.core_type<tc>, window_params = [{transform_indices = @transform_0, window_bounds = array<i64: 1, 64, 256>}, {transform_indices = @transform_1, window_bounds = array<i64: 1, 64, 256>}]} {
    %c0 = arith.constant 0 : index
    %c0_0 = arith.constant 0 : index
    %c0_1 = arith.constant 0 : index
    %0 = vector.load %arg2[%c0, %c0_0, %c0_1] : memref<1x64x256xf32, #tpu.memory_space<vmem>>, vector<1x64x256xf32>
    %cst = arith.constant dense<0.000000e+00> : vector<1x64xf32>
    %1 = vector.multi_reduction <add>, %0, %cst [2] : vector<1x64x256xf32> to vector<1x64xf32>
    %2 = vector.shape_cast %1 : vector<1x64xf32> to vector<1x64x1xf32>
    %cst_2 = arith.constant 3.906250e-03 : f32
    %3 = vector.broadcast %cst_2 : f32 to vector<1x64x1xf32>
    %4 = arith.mulf %2, %3 : vector<1x64x1xf32>
    %cst_3 = arith.constant 0.000000e+00 : f32
    %5 = vector.broadcast %cst_3 : f32 to vector<1x1x1xf32>
    %6 = tpu.concatenate %5, %4, %5 in 1 : vector<1x1x1xf32>, vector<1x64x1xf32>, vector<1x1x1xf32> -> vector<1x66x1xf32>
    %c0_4 = arith.constant 0 : index
    %7 = memref.load %arg1[%c0_4] : memref<3xf32, #tpu.memory_space<smem>>
    %8 = vector.extract_strided_slice %6 {offsets = [0, 0, 0], sizes = [1, 64, 1], strides = [1, 1, 1]} : vector<1x66x1xf32> to vector<1x64x1xf32>
    %9 = vector.broadcast %7 : f32 to vector<1x64x1xf32>
    %10 = arith.mulf %9, %8 : vector<1x64x1xf32>
    %c1 = arith.constant 1 : index
    %11 = memref.load %arg1[%c1] : memref<3xf32, #tpu.memory_space<smem>>
    %12 = vector.extract_strided_slice %6 {offsets = [0, 1, 0], sizes = [1, 64, 1], strides = [1, 1, 1]} : vector<1x66x1xf32> to vector<1x64x1xf32>
    %13 = vector.broadcast %11 : f32 to vector<1x64x1xf32>
    %14 = arith.mulf %13, %12 : vector<1x64x1xf32>
    %15 = arith.addf %10, %14 : vector<1x64x1xf32>
    %c2 = arith.constant 2 : index
    %16 = memref.load %arg1[%c2] : memref<3xf32, #tpu.memory_space<smem>>
    %17 = vector.extract_strided_slice %6 {offsets = [0, 2, 0], sizes = [1, 64, 1], strides = [1, 1, 1]} : vector<1x66x1xf32> to vector<1x64x1xf32>
    %18 = vector.broadcast %16 : f32 to vector<1x64x1xf32>
    %19 = arith.mulf %18, %17 : vector<1x64x1xf32>
    %20 = arith.addf %15, %19 : vector<1x64x1xf32>
    %21 = arith.negf %20 : vector<1x64x1xf32>
    %22 = math.exp %21 : vector<1x64x1xf32>
    %cst_5 = arith.constant 1.000000e+00 : f32
    %23 = vector.broadcast %cst_5 : f32 to vector<1x64x1xf32>
    %24 = arith.addf %23, %22 : vector<1x64x1xf32>
    %25 = arith.divf %23, %24 : vector<1x64x1xf32>
    %26 = vector.broadcast %25 : vector<1x64x1xf32> to vector<1x64x256xf32>
    %27 = arith.mulf %0, %26 : vector<1x64x256xf32>
    %c0_6 = arith.constant 0 : index
    %c0_7 = arith.constant 0 : index
    %c0_8 = arith.constant 0 : index
    %28 = vector.load %arg3[%c0_6, %c0_7, %c0_8] : memref<1x64x256xf32, #tpu.memory_space<vmem>>, vector<1x64x256xf32>
    tpu.vector_store %arg3[%c0_6, %c0_7, %c0_8], %27 {strides = array<i32>} : memref<1x64x256xf32, #tpu.memory_space<vmem>>, vector<1x64x256xf32>,
    return
  }
  func.func @transform_0(%arg0: i32, %arg1: memref<3xf32, #tpu.memory_space<smem>>) -> (i32, i32, i32) {
    %c0_i32 = arith.constant 0 : i32
    %c0_i32_0 = arith.constant 0 : i32
    %c0_i32_1 = arith.constant 0 : i32
    return %arg0, %c0_i32, %c0_i32_0 : i32, i32, i32
  }
  func.func @transform_1(%arg0: i32, %arg1: memref<3xf32, #tpu.memory_space<smem>>) -> (i32, i32, i32) {
    %c0_i32 = arith.constant 0 : i32
    %c0_i32_0 = arith.constant 0 : i32
    %c0_i32_1 = arith.constant 0 : i32
    return %arg0, %c0_i32, %c0_i32_0 : i32, i32, i32
  }
}

</mosaic_0001>

<llo_original>
// kernel: tpu_custom_call.1
$region0: #{tpu_custom_call.1}
  #allocation0 [shape = 'u32[]', space=smem, size = 0x4, offset = 0x4, fixed_abs, tag = 'smem constant byte address 0x4 - core index']
  #allocation1 [shape = 'u32[72,128]{1,0:T(1,128)}', space=vmem, size = 0x9000, scoped, tag = 'internal scratch']
  #allocation2 [shape = 's32[1]{0}', space=sflag, size = 0x4, scoped, tag = 'scoped memory for tpu_custom_call.1']
  #allocation3 [shape = 'u8[512]{0}', space=smem, size = 0x200, scoped, tag = 'prefetched SMEM operand 0']
  %s0 = inlined_call_operand.hbm [shape: f32[3], index: 0, kind: input, shape index: {}]
  %s1 = inlined_call_operand.hbm [shape: f32[2,64,256], index: 1, kind: input, shape index: {}]
  %s2 = inlined_call_operand.hbm [shape: f32[2,64,256], index: 2, kind: output, shape index: {}]
  %s3 = sld [smem:[#allocation0]]
  $region41: #{tpu_custom_call.1} parent=0
    _
  %s5 = ssub.s32 1, %s3
  %s6 = scalar_select 0, %s5, %s3
  %s8 = sshll.u32 %s0, 4
  %s9 = int_to_ptr.hbm [resolvable:$true] %s8
  %11 = dma.hbm_to_smem %s9, 16, [#allocation3], [#allocation2]
  %13 = dma.done [#allocation2], 16
  %14 = sfence
  $region1: #{tpu_custom_call.1} parent=0
    #allocation4 [shape = 'u8[131072]{0}', space=vmem, size = 0x20000, scoped, tag = 'input window, operand 1']
    #allocation5 [shape = 's32[2]{0}', space=sflag, size = 0x8, scoped, tag = 'scoped memory for tpu_custom_call.1']
    #allocation6 [shape = 's32[2]{0}', space=sflag, size = 0x8, scoped, tag = 'scoped memory for tpu_custom_call.1']
    #allocation7 [shape = 'u8[131072]{0}', space=vmem, size = 0x20000, scoped, tag = 'output window, operand 0']
    %15 = vsyncpa [#allocation5], 0
    %s16 = scalar_lea.sflag [#allocation5], 1
    %17 = vsyncpa %s16, 0
    %18 = vsyncpa [#allocation6], 0
    %s19 = scalar_lea.sflag [#allocation6], 1
    %20 = vsyncpa %s19, 0
    loop: start=0, step=1, limit=4
    $region2: #{tpu_custom_call.1} parent=1 // loop_pre_header
      _
    $region3: #{tpu_custom_call.1} parent=1 // loop_header
      %s22 = sphi 0, %s26
      %p23 = scmp.ge.s32.totalorder %s22, 4
      %s32 = sphi 0, %s34
      %s35 = sphi 0, %s32
      %s36 = sphi 0, %s35
      %s52 = sphi 0, %s36
      %s58 = sphi 0, %s60
      %s61 = sphi 0, %s58
      %s62 = sphi 0, %s61
      %s78 = sphi 0, %s62
    $region4: #{tpu_custom_call.1} parent=1 // loop_header_branch
      %25 = sbr.rel (%p23) target = $region8
    $region5: #{tpu_custom_call.1} parent=1 // loop_body
      %s27 = ssub.s32 %s22, 1
      %s28 = ssub.s32 %s22, 2
      %s29 = sadd.s32 %s22, 1
      %s30 = ssub.s32 %s22, %s29
      %p31 = scmp.eq.s32.totalorder %s30, 0
      %s33 = sadd.s32 %s32, 1
      %s34 = scalar_select %p31, %s32, %s33
      %p37 = pneg %p31
      %p38 = scmp.eq.s32.totalorder %s22, 1
      %p39 = por %p37, %p38
      %p40 = scmp.ne.s32.totalorder %s32, %s35
      %p41 = scmp.eq.s32.totalorder %s22, 0
      %p42 = por %p40, %p41
      %p43 = scmp.ne.s32.totalorder %s32, %s35
      %p44 = scmp.eq.s32.totalorder %s27, 1
      %p45 = por %p43, %p44
      %p46 = scmp.ne.s32.totalorder %s35, %s36
      %p47 = scmp.eq.s32.totalorder %s27, 0
      %p48 = por %p46, %p47
      %p49 = scmp.ne.s32.totalorder %s35, %s36
      %p50 = scmp.eq.s32.totalorder %s28, 1
      %p51 = por %p49, %p50
      %p53 = scmp.ne.s32.totalorder %s36, %s52
      %p54 = scmp.eq.s32.totalorder %s28, 0
      %p55 = por %p53, %p54
      %s56 = ssub.s32 %s22, %s29
      %p57 = scmp.eq.s32.totalorder %s56, 0
      %s59 = sadd.s32 %s58, 1
      %s60 = scalar_select %p57, %s58, %s59
      %p63 = pneg %p57
      %p64 = scmp.eq.s32.totalorder %s22, 1
      %p65 = por %p63, %p64
      %p66 = scmp.ne.s32.totalorder %s58, %s61
      %p67 = scmp.eq.s32.totalorder %s22, 0
      %p68 = por %p66, %p67
      %p69 = scmp.ne.s32.totalorder %s58, %s61
      %p70 = scmp.eq.s32.totalorder %s27, 1
      %p71 = por %p69, %p70
      %p72 = scmp.ne.s32.totalorder %s61, %s62
      %p73 = scmp.eq.s32.totalorder %s27, 0
      %p74 = por %p72, %p73
      %p75 = scmp.ne.s32.totalorder %s61, %s62
      %p76 = scmp.eq.s32.totalorder %s28, 1
      %p77 = por %p75, %p76
      %p79 = scmp.ne.s32.totalorder %s62, %s78
      %p80 = scmp.eq.s32.totalorder %s28, 0
      %p81 = por %p79, %p80
      %p82 = scmp.le.s32.totalorder 1, %s22
      %p83 = scmp.lt.s32.totalorder %s22, 3
      %p84 = pnand %p82, %p83
      %p85 = pneg %p84
      // Predicated region
      $region9: #{tpu_custom_call.1} parent=5 // pred_check
        _
      $region10: #{tpu_custom_call.1} parent=5 // pred_check_branch
        %87 = sbr.rel (%p84) target = $region12
      $region11: #{tpu_custom_call.1} parent=5 // pred_region
        %s88 = ssub.s32 %s22, 1
      $region12: #{tpu_custom_call.1} parent=5 // pred_fallthru
        _
      %p89 = scmp.lt.s32.totalorder %s22, 2
      // Predicated region
      $region13: #{tpu_custom_call.1} parent=5 // pred_check
        %p90 = pneg %p89
      $region14: #{tpu_custom_call.1} parent=5 // pred_check_branch
        %92 = sbr.rel (%p90) target = $region16
      $region15: #{tpu_custom_call.1} parent=5 // pred_region
        // Predicated region
        $region17: #{tpu_custom_call.1} parent=15 // pred_check
          %p93 = pneg %p42
        $region18: #{tpu_custom_call.1} parent=15 // pred_check_branch
          %95 = sbr.rel (%p93) target = $region20
        $region19: #{tpu_custom_call.1} parent=15 // pred_region
          %s96 = sand.u32 %s32, 1
          %s97 = scalar_lea.sflag [#allocation5], %s96
          %s98 = sand.u32 %s32, 1
          %s99 = smul.addr %s98, 128
          %s100 = scalar_lea.vmem [#allocation4], %s99
          %102 = vsyncadd %s97, 0
          %s103 = smul.addr %s22, 16
          %s104 = smul.addr %s103, 8
          %s105 = scalar_lea.hbm %s1, %s104
          %s106 = sshll.u32 %s105, 4
          %s107 = int_to_ptr.hbm [resolvable:$true] %s106
          %s108 = sshll.u32 %s100, 4
          %s109 = int_to_ptr.vmem [resolvable:$true] %s108
          %114 = dma.hbm_to_vmem [thread:$0]  %s107, 2048, %s109, %s97, 256, 256, 16
        $region20: #{tpu_custom_call.1} parent=15 // pred_fallthru
          _
      $region16: #{tpu_custom_call.1} parent=5 // pred_fallthru
        _
      %p115 = scmp.le.s32.totalorder 1, %s22
      %p116 = scmp.lt.s32.totalorder %s22, 3
      %p117 = pnand %p115, %p116
      %p118 = pneg %p117
      // Predicated region
      $region21: #{tpu_custom_call.1} parent=5 // pred_check
        _
      $region22: #{tpu_custom_call.1} parent=5 // pred_check_branch
        %120 = sbr.rel (%p117) target = $region24
      $region23: #{tpu_custom_call.1} parent=5 // pred_region
        %s121 = ssub.s32 %s22, 1
        %s122 = sand.u32 %s35, 1
        %s123 = scalar_lea.sflag [#allocation5], %s122
        %s124 = sand.u32 %s35, 1
        %s125 = smul.addr %s124, 128
        %s126 = scalar_lea.vmem [#allocation4], %s125
        // Predicated region
        $region25: #{tpu_custom_call.1} parent=23 // pred_check
          %p127 = pneg %p48
        $region26: #{tpu_custom_call.1} parent=23 // pred_check_branch
          %129 = sbr.rel (%p127) target = $region28
        $region27: #{tpu_custom_call.1} parent=23 // pred_region
          %131 = dma.done %s123, 2048
        $region28: #{tpu_custom_call.1} parent=23 // pred_fallthru
          _
        %s132 = sand.u32 %s35, 1
        %s133 = scalar_lea.sflag [#allocation5], %s132
        %s134 = sand.u32 %s35, 1
        %s135 = smul.addr %s134, 128
        %s136 = scalar_lea.vmem [#allocation4], %s135
        %p137 = pneg %p48
        %p138 = pneg %p45
        %p139 = pneg %p74
        %p140 = pneg %p71
        %s141 = sand.u32 %s61, 1
        %s142 = scalar_lea.sflag [#allocation6], %s141
        %s143 = sand.u32 %s61, 1
        %s144 = smul.addr %s143, 128
        %s145 = scalar_lea.vmem [#allocation7], %s144
        %v146 = vld [vmem:[%s126] sm:$0xff]
        %v147 = vld [vmem:[%s126 + $0x8] sm:$0xff]
        %v148 = vld [vmem:[%s126 + $0x10] sm:$0xff]
        %v149 = vld [vmem:[%s126 + $0x18] sm:$0xff]
        %v150 = vld [vmem:[%s126 + $0x20] sm:$0xff]
        %v151 = vld [vmem:[%s126 + $0x28] sm:$0xff]
        %v152 = vld [vmem:[%s126 + $0x30] sm:$0xff]
        %v153 = vld [vmem:[%s126 + $0x38] sm:$0xff]
        %v154 = vld [vmem:[%s126 + $0x40] sm:$0xff]
        %v155 = vld [vmem:[%s126 + $0x48] sm:$0xff]
        %v156 = vld [vmem:[%s126 + $0x50] sm:$0xff]
        %v157 = vld [vmem:[%s126 + $0x58] sm:$0xff]
        %v158 = vld [vmem:[%s126 + $0x60] sm:$0xff]
        %v159 = vld [vmem:[%s126 + $0x68] sm:$0xff]
        %v160 = vld [vmem:[%s126 + $0x70] sm:$0xff]
        %v161 = vld [vmem:[%s126 + $0x78] sm:$0xff]
        %v162 = vadd.f32 %v146, %v147
        %163 = vadd.xlane.f32.xlu0 %v162
        %v164 = vpop.xlane.xlu0 %163
        %v165 = vadd.f32 %v148, %v149
        %166 = vadd.xlane.f32.xlu0 %v165
        %v167 = vpop.xlane.xlu0 %166
        %v168 = vadd.f32 %v150, %v151
        %169 = vadd.xlane.f32.xlu0 %v168
        %v170 = vpop.xlane.xlu0 %169
        %v171 = vadd.f32 %v152, %v153
        %172 = vadd.xlane.f32.xlu0 %v171
        %v173 = vpop.xlane.xlu0 %172
        %v174 = vadd.f32 %v154, %v155
        %175 = vadd.xlane.f32.xlu0 %v174
        %v176 = vpop.xlane.xlu0 %175
        %v177 = vadd.f32 %v156, %v157
        %178 = vadd.xlane.f32.xlu0 %v177
        %v179 = vpop.xlane.xlu0 %178
        %v180 = vadd.f32 %v158, %v159
        %181 = vadd.xlane.f32.xlu0 %v180
        %v182 = vpop.xlane.xlu0 %181
        %v183 = vadd.f32 %v160, %v161
        %184 = vadd.xlane.f32.xlu0 %v183
        %v185 = vpop.xlane.xlu0 %184
        %v186 = vmul.f32 %v164, 0.00390625
        %v187 = vmul.f32 %v167, 0.00390625
        %v188 = vmul.f32 %v170, 0.00390625
        %v189 = vmul.f32 %v173, 0.00390625
        %v190 = vmul.f32 %v176, 0.00390625
        %v191 = vmul.f32 %v179, 0.00390625
        %v192 = vmul.f32 %v182, 0.00390625
        %v193 = vmul.f32 %v185, 0.00390625
        %vm202 = vcmask 1040384
        %v203 = vrot.slane %v186, 7
        %v204 = vrot.slane %v187, 7
        %v205 = vsel %vm202, %v203, %v204
        %v206 = vrot.slane %v188, 7
        %v207 = vsel %vm202, %v204, %v206
        %v208 = vrot.slane %v189, 7
        %v209 = vsel %vm202, %v206, %v208
        %v210 = vrot.slane %v190, 7
        %v211 = vsel %vm202, %v208, %v210
        %v212 = vrot.slane %v191, 7
        %v213 = vsel %vm202, %v210, %v212
        %v214 = vrot.slane %v192, 7
        %v215 = vsel %vm202, %v212, %v214
        %v216 = vrot.slane %v193, 7
        %v217 = vsel %vm202, %v214, %v216
        %v227 = vsel %vm202, 0.0, %v203
        %v228 = vsel %vm202, %v216, 0.0
        %s229 = sld [smem:[#allocation3]]
        %v230 = vstv %s229
        %v231 = vmul.f32 %v230, %v227
        %v232 = vmul.f32 %v230, %v205
        %v233 = vmul.f32 %v230, %v207
        %v234 = vmul.f32 %v230, %v209
        %v235 = vmul.f32 %v230, %v211
        %v236 = vmul.f32 %v230, %v213
        %v237 = vmul.f32 %v230, %v215
        %v238 = vmul.f32 %v230, %v217
        %s239 = sld [smem:[#allocation3 + $0x1]]
        %v240 = vstv %s239
        %v241 = vmul.f32 %v240, %v227
        %v242 = vmul.f32 %v240, %v205
        %v243 = vmul.f32 %v240, %v207
        %v244 = vmul.f32 %v240, %v209
        %v245 = vmul.f32 %v240, %v211
        %v246 = vmul.f32 %v240, %v213
        %v247 = vmul.f32 %v240, %v215
        %v248 = vmul.f32 %v240, %v217
        %v249 = vmul.f32 %v240, %v228
        %vm259 = vcmask 1046528
        %v260 = vrot.slane %v241, 1
        %v261 = vrot.slane %v242, 1
        %v262 = vsel %vm259, %v260, %v261
        %v263 = vrot.slane %v243, 1
        %v264 = vsel %vm259, %v261, %v263
        %v265 = vrot.slane %v244, 1
        %v266 = vsel %vm259, %v263, %v265
        %v267 = vrot.slane %v245, 1
        %v268 = vsel %vm259, %v265, %v267
        %v269 = vrot.slane %v246, 1
        %v270 = vsel %vm259, %v267, %v269
        %v271 = vrot.slane %v247, 1
        %v272 = vsel %vm259, %v269, %v271
        %v273 = vrot.slane %v248, 1
        %v274 = vsel %vm259, %v271, %v273
        %v275 = vrot.slane %v249, 1
        %v276 = vsel %vm259, %v273, %v275
        %v285 = vadd.f32 %v231, %v262
        %v286 = vadd.f32 %v232, %v264
        %v287 = vadd.f32 %v233, %v266
        %v288 = vadd.f32 %v234, %v268
        %v289 = vadd.f32 %v235, %v270
        %v290 = vadd.f32 %v236, %v272
        %v291 = vadd.f32 %v237, %v274
        %v292 = vadd.f32 %v238, %v276
        %s293 = sld [smem:[#allocation3 + $0x2]]
        %v294 = vstv %s293
        %v295 = vmul.f32 %v294, %v227
        %v296 = vmul.f32 %v294, %v205
        %v297 = vmul.f32 %v294, %v207
        %v298 = vmul.f32 %v294, %v209
        %v299 = vmul.f32 %v294, %v211
        %v300 = vmul.f32 %v294, %v213
        %v301 = vmul.f32 %v294, %v215
        %v302 = vmul.f32 %v294, %v217
        %v303 = vmul.f32 %v294, %v228
        %vm313 = vcmask 1045504
        %v314 = vrot.slane %v295, 2
        %v315 = vrot.slane %v296, 2
        %v316 = vsel %vm313, %v314, %v315
        %v317 = vrot.slane %v297, 2
        %v318 = vsel %vm313, %v315, %v317
        %v319 = vrot.slane %v298, 2
        %v320 = vsel %vm313, %v317, %v319
        %v321 = vrot.slane %v299, 2
        %v322 = vsel %vm313, %v319, %v321
        %v323 = vrot.slane %v300, 2
        %v324 = vsel %vm313, %v321, %v323
        %v325 = vrot.slane %v301, 2
        %v326 = vsel %vm313, %v323, %v325
        %v327 = vrot.slane %v302, 2
        %v328 = vsel %vm313, %v325, %v327
        %v329 = vrot.slane %v303, 2
        %v330 = vsel %vm313, %v327, %v329
        %v339 = vadd.f32 %v285, %v316
        %v340 = vadd.f32 %v286, %v318
        %v341 = vadd.f32 %v287, %v320
        %v342 = vadd.f32 %v288, %v322
        %v343 = vadd.f32 %v289, %v324
        %v344 = vadd.f32 %v290, %v326
        %v345 = vadd.f32 %v291, %v328
        %v346 = vadd.f32 %v292, %v330
        %v347 = vxor.u32 %v339, 2147483648
        %v348 = vxor.u32 %v340, 2147483648
        %v349 = vxor.u32 %v341, 2147483648
        %v350 = vxor.u32 %v342, 2147483648
        %v351 = vxor.u32 %v343, 2147483648
        %v352 = vxor.u32 %v344, 2147483648
        %v353 = vxor.u32 %v345, 2147483648
        %v354 = vxor.u32 %v346, 2147483648
        %v355 = vmul.f32 %v347, 1.442695
        %v356 = vpow.pop %v355
        %v357 = vmul.f32 %v348, 1.442695
        %v358 = vpow.pop %v357
        %v359 = vmul.f32 %v349, 1.442695
        %v360 = vpow.pop %v359
        %v361 = vmul.f32 %v350, 1.442695
        %v362 = vpow.pop %v361
        %v363 = vmul.f32 %v351, 1.442695
        %v364 = vpow.pop %v363
        %v365 = vmul.f32 %v352, 1.442695
        %v366 = vpow.pop %v365
        %v367 = vmul.f32 %v353, 1.442695
        %v368 = vpow.pop %v367
        %v369 = vmul.f32 %v354, 1.442695
        %v370 = vpow.pop %v369
        %v371 = vadd.f32 %v356, 1.0
        %v372 = vadd.f32 %v358, 1.0
        %v373 = vadd.f32 %v360, 1.0
        %v374 = vadd.f32 %v362, 1.0
        %v375 = vadd.f32 %v364, 1.0
        %v376 = vadd.f32 %v366, 1.0
        %v377 = vadd.f32 %v368, 1.0
        %v378 = vadd.f32 %v370, 1.0
        %v379 = vrcp.pop %v371
        %v380 = vmul.f32 %v371, %v379
        %v381 = vsub.f32 1.0, %v380
        %v382 = vmul.f32 %v379, %v381
        %v383 = vadd.f32 %v379, %v382
        %vm384 = vweird.f32 %v371
        %vm385 = vweird.f32 %v379
        %vm386 = vmor %vm384, %vm385
        %v387 = vsel %vm386, %v379, %v383
        %v388 = vand.u32 2147483647, %v371
        %vm389 = vcmp.eq.f32.partialorder %v388, 8.507059e+37
        %v390 = vand.u32 %v371, 2147483648
        %v391 = vor.u32 1.1754944e-38, %v390
        %v392 = vsel %vm389, %v391, %v387
        %v393 = vmul.f32 1.0, %v392
        %v394 = vrcp.pop %v372
        %v395 = vmul.f32 %v372, %v394
        %v396 = vsub.f32 1.0, %v395
        %v397 = vmul.f32 %v394, %v396
        %v398 = vadd.f32 %v394, %v397
        %vm399 = vweird.f32 %v372
        %vm400 = vweird.f32 %v394
        %vm401 = vmor %vm399, %vm400
        %v402 = vsel %vm401, %v394, %v398
        %v403 = vand.u32 2147483647, %v372
        %vm404 = vcmp.eq.f32.partialorder %v403, 8.507059e+37
        %v405 = vand.u32 %v372, 2147483648
        %v406 = vor.u32 1.1754944e-38, %v405
        %v407 = vsel %vm404, %v406, %v402
        %v408 = vmul.f32 1.0, %v407
        %v409 = vrcp.pop %v373
        %v410 = vmul.f32 %v373, %v409
        %v411 = vsub.f32 1.0, %v410
        %v412 = vmul.f32 %v409, %v411
        %v413 = vadd.f32 %v409, %v412
        %vm414 = vweird.f32 %v373
        %vm415 = vweird.f32 %v409
        %vm416 = vmor %vm414, %vm415
        %v417 = vsel %vm416, %v409, %v413
        %v418 = vand.u32 2147483647, %v373
        %vm419 = vcmp.eq.f32.partialorder %v418, 8.507059e+37
        %v420 = vand.u32 %v373, 2147483648
        %v421 = vor.u32 1.1754944e-38, %v420
        %v422 = vsel %vm419, %v421, %v417
        %v423 = vmul.f32 1.0, %v422
        %v424 = vrcp.pop %v374
        %v425 = vmul.f32 %v374, %v424
        %v426 = vsub.f32 1.0, %v425
        %v427 = vmul.f32 %v424, %v426
        %v428 = vadd.f32 %v424, %v427
        %vm429 = vweird.f32 %v374
        %vm430 = vweird.f32 %v424
        %vm431 = vmor %vm429, %vm430
        %v432 = vsel %vm431, %v424, %v428
        %v433 = vand.u32 2147483647, %v374
        %vm434 = vcmp.eq.f32.partialorder %v433, 8.507059e+37
        %v435 = vand.u32 %v374, 2147483648
        %v436 = vor.u32 1.1754944e-38, %v435
        %v437 = vsel %vm434, %v436, %v432
        %v438 = vmul.f32 1.0, %v437
        %v439 = vrcp.pop %v375
        %v440 = vmul.f32 %v375, %v439
        %v441 = vsub.f32 1.0, %v440
        %v442 = vmul.f32 %v439, %v441
        %v443 = vadd.f32 %v439, %v442
        %vm444 = vweird.f32 %v375
        %vm445 = vweird.f32 %v439
        %vm446 = vmor %vm444, %vm445
        %v447 = vsel %vm446, %v439, %v443
        %v448 = vand.u32 2147483647, %v375
        %vm449 = vcmp.eq.f32.partialorder %v448, 8.507059e+37
        %v450 = vand.u32 %v375, 2147483648
        %v451 = vor.u32 1.1754944e-38, %v450
        %v452 = vsel %vm449, %v451, %v447
        %v453 = vmul.f32 1.0, %v452
        %v454 = vrcp.pop %v376
        %v455 = vmul.f32 %v376, %v454
        %v456 = vsub.f32 1.0, %v455
        %v457 = vmul.f32 %v454, %v456
        %v458 = vadd.f32 %v454, %v457
        %vm459 = vweird.f32 %v376
        %vm460 = vweird.f32 %v454
        %vm461 = vmor %vm459, %vm460
        %v462 = vsel %vm461, %v454, %v458
        %v463 = vand.u32 2147483647, %v376
        %vm464 = vcmp.eq.f32.partialorder %v463, 8.507059e+37
        %v465 = vand.u32 %v376, 2147483648
        %v466 = vor.u32 1.1754944e-38, %v465
        %v467 = vsel %vm464, %v466, %v462
        %v468 = vmul.f32 1.0, %v467
        %v469 = vrcp.pop %v377
        %v470 = vmul.f32 %v377, %v469
        %v471 = vsub.f32 1.0, %v470
        %v472 = vmul.f32 %v469, %v471
        %v473 = vadd.f32 %v469, %v472
        %vm474 = vweird.f32 %v377
        %vm475 = vweird.f32 %v469
        %vm476 = vmor %vm474, %vm475
        %v477 = vsel %vm476, %v469, %v473
        %v478 = vand.u32 2147483647, %v377
        %vm479 = vcmp.eq.f32.partialorder %v478, 8.507059e+37
        %v480 = vand.u32 %v377, 2147483648
        %v481 = vor.u32 1.1754944e-38, %v480
        %v482 = vsel %vm479, %v481, %v477
        %v483 = vmul.f32 1.0, %v482
        %v484 = vrcp.pop %v378
        %v485 = vmul.f32 %v378, %v484
        %v486 = vsub.f32 1.0, %v485
        %v487 = vmul.f32 %v484, %v486
        %v488 = vadd.f32 %v484, %v487
        %vm489 = vweird.f32 %v378
        %vm490 = vweird.f32 %v484
        %vm491 = vmor %vm489, %vm490
        %v492 = vsel %vm491, %v484, %v488
        %v493 = vand.u32 2147483647, %v378
        %vm494 = vcmp.eq.f32.partialorder %v493, 8.507059e+37
        %v495 = vand.u32 %v378, 2147483648
        %v496 = vor.u32 1.1754944e-38, %v495
        %v497 = vsel %vm494, %v496, %v492
        %v498 = vmul.f32 1.0, %v497
        %500 = vset.pattern.permute.xlu0 0
        %501 = vperm.xlu0 %500, %v393
        %v502 = vpop.permute.xlu0 %501
        %505 = vset.pattern.permute.xlu0 0
        %506 = vperm.xlu0 %505, %v408
        %v507 = vpop.permute.xlu0 %506
        %510 = vset.pattern.permute.xlu0 0
        %511 = vperm.xlu0 %510, %v423
        %v512 = vpop.permute.xlu0 %511
        %515 = vset.pattern.permute.xlu0 0
        %516 = vperm.xlu0 %515, %v438
        %v517 = vpop.permute.xlu0 %516
        %520 = vset.pattern.permute.xlu0 0
        %521 = vperm.xlu0 %520, %v453
        %v522 = vpop.permute.xlu0 %521
        %525 = vset.pattern.permute.xlu0 0
        %526 = vperm.xlu0 %525, %v468
        %v527 = vpop.permute.xlu0 %526
        %530 = vset.pattern.permute.xlu0 0
        %531 = vperm.xlu0 %530, %v483
        %v532 = vpop.permute.xlu0 %531
        %535 = vset.pattern.permute.xlu0 0
        %536 = vperm.xlu0 %535, %v498
        %v537 = vpop.permute.xlu0 %536
        %v539 = vmul.f32 %v146, %v502
        %v540 = vmul.f32 %v147, %v502
        %v541 = vmul.f32 %v148, %v507
        %v542 = vmul.f32 %v149, %v507
        %v543 = vmul.f32 %v150, %v512
        %v544 = vmul.f32 %v151, %v512
        %v545 = vmul.f32 %v152, %v517
        %v546 = vmul.f32 %v153, %v517
        %v547 = vmul.f32 %v154, %v522
        %v548 = vmul.f32 %v155, %v522
        %v549 = vmul.f32 %v156, %v527
        %v550 = vmul.f32 %v157, %v527
        %v551 = vmul.f32 %v158, %v532
        %v552 = vmul.f32 %v159, %v532
        %v553 = vmul.f32 %v160, %v537
        %v554 = vmul.f32 %v161, %v537
        %555 = vst [vmem:[%s145] sm:$0xff] %v539
        %556 = vst [vmem:[%s145 + $0x8] sm:$0xff] %v540
        %557 = vst [vmem:[%s145 + $0x10] sm:$0xff] %v541
        %558 = vst [vmem:[%s145 + $0x18] sm:$0xff] %v542
        %559 = vst [vmem:[%s145 + $0x20] sm:$0xff] %v543
        %560 = vst [vmem:[%s145 + $0x28] sm:$0xff] %v544
        %561 = vst [vmem:[%s145 + $0x30] sm:$0xff] %v545
        %562 = vst [vmem:[%s145 + $0x38] sm:$0xff] %v546
        %563 = vst [vmem:[%s145 + $0x40] sm:$0xff] %v547
        %564 = vst [vmem:[%s145 + $0x48] sm:$0xff] %v548
        %565 = vst [vmem:[%s145 + $0x50] sm:$0xff] %v549
        %566 = vst [vmem:[%s145 + $0x58] sm:$0xff] %v550
        %567 = vst [vmem:[%s145 + $0x60] sm:$0xff] %v551
        %568 = vst [vmem:[%s145 + $0x68] sm:$0xff] %v552
        %569 = vst [vmem:[%s145 + $0x70] sm:$0xff] %v553
        %570 = vst [vmem:[%s145 + $0x78] sm:$0xff] %v554
        %s571 = sand.u32 %s61, 1
        %s572 = scalar_lea.sflag [#allocation6], %s571
        %s573 = sand.u32 %s61, 1
        %s574 = smul.addr %s573, 128
        %s575 = scalar_lea.vmem [#allocation7], %s574
        // Predicated region
        $region29: #{tpu_custom_call.1} parent=23 // pred_check
          %p576 = pneg %p71
        $region30: #{tpu_custom_call.1} parent=23 // pred_check_branch
          %578 = sbr.rel (%p576) target = $region32
        $region31: #{tpu_custom_call.1} parent=23 // pred_region
          %580 = vsyncadd %s572, 0
          %s581 = smul.addr %s27, 16
          %s582 = smul.addr %s581, 8
          %s583 = scalar_lea.hbm %s2, %s582
          %s584 = sshll.u32 %s575, 4
          %s585 = int_to_ptr.vmem [resolvable:$true] %s584
          %s586 = sshll.u32 %s583, 4
          %s587 = int_to_ptr.hbm [resolvable:$true] %s586
          %592 = dma.vmem_to_hbm [thread:$0]  %s585, 2048, %s587, %s572, 256, 256, 16
        $region32: #{tpu_custom_call.1} parent=23 // pred_fallthru
          _
      $region24: #{tpu_custom_call.1} parent=5 // pred_fallthru
        _
      %p593 = scmp.le.s32.totalorder 2, %s22
      // Predicated region
      $region33: #{tpu_custom_call.1} parent=5 // pred_check
        %p594 = pneg %p593
      $region34: #{tpu_custom_call.1} parent=5 // pred_check_branch
        %596 = sbr.rel (%p594) target = $region36
      $region35: #{tpu_custom_call.1} parent=5 // pred_region
        %s597 = ssub.s32 %s22, 2
        // Predicated region
        $region37: #{tpu_custom_call.1} parent=35 // pred_check
          %p598 = pneg %p77
        $region38: #{tpu_custom_call.1} parent=35 // pred_check_branch
          %600 = sbr.rel (%p598) target = $region40
        $region39: #{tpu_custom_call.1} parent=35 // pred_region
          %s601 = sand.u32 %s62, 1
          %s602 = scalar_lea.sflag [#allocation6], %s601
          %s603 = sand.u32 %s62, 1
          %s604 = smul.addr %s603, 128
          %s605 = scalar_lea.vmem [#allocation7], %s604
          %607 = dma.done %s602, 2048
        $region40: #{tpu_custom_call.1} parent=35 // pred_fallthru
          _
      $region36: #{tpu_custom_call.1} parent=5 // pred_fallthru
        _
    $region6: #{tpu_custom_call.1} parent=1 // loop_footer
      %s26 = sadd.s32 1, %s22
    $region7: #{tpu_custom_call.1} parent=1 // loop_footer_branch
      %21 = sbr.rel target = $region3
    $region8: #{tpu_custom_call.1} parent=1 // loop_exit
      _
    %608 = vsyncpa [#allocation5], 1
    %s609 = scalar_lea.sflag [#allocation5], 1
    %610 = vsyncpa %s609, 1
    %611 = vsyncpa [#allocation6], 1
    %s612 = scalar_lea.sflag [#allocation6], 1
    %613 = vsyncpa %s612, 1

</llo_original>
